<compile_context>
chip_gen: v6e
topology: v6e:2x2x1
jax: 0.10.0
libtpu: 0.0.40
codegen_flags: <defaults>
</compile_context>

<pallas_src>
import numpy as np
import jax
import jax.numpy as jnp
from jax.experimental import pallas as pl
from jax.experimental.pallas import tpu as pltpu


_PALLAS_MIN_ROW_BYTES = 256 * 1024  # below this, XLA take+lerp wins


def _mix_kernel(idx_a_ref, idx_b_ref, s_ref, a_ref, b_ref, o_ref):
    # idx_a / idx_b / s are scalar-prefetched into SMEM; idx_* are only used by
    # the index_maps (gather of source rows a/b).
    del idx_a_ref, idx_b_ref
    k = pl.program_id(0)
    s = s_ref[k]  # f32 scalar

    @pl.when(s >= 1.0)
    def _():
        # Identity rows (s encoded as exactly 1.0): bit-exact copy, no f32
        # round-trip, immune to Inf/NaN arithmetic artefacts.
        o_ref[...] = a_ref[...]

    @pl.when(s < 1.0)
    def _():
        a = a_ref[...].astype(jnp.float32)
        b = b_ref[...].astype(jnp.float32)
        # Same formula / rounding order as the PyTorch reference.
        o_ref[...] = (s * a + (1.0 - s) * b).astype(o_ref.dtype)


def _choose_rows(R, itemsize, target_bytes=4 << 20):
    """Rows (of 128 lanes) per block.

    Dtype-aware sublane granularity (8 f32 / 16 bf16 / 32 int8), capped at
    ~target_bytes per buffer so the 6 double-buffered blocks (a, b, o) stay
    around 24 MiB — safe even on v7x's 64 MiB VMEM.  A ragged last chunk is
    handled by Pallas edge masking, so no divisibility search is needed.
    """
    gran = max(8, 32 // itemsize)
    target_rows = max(gran, (target_bytes // (128 * itemsize)) // gran * gran)
    return R if R <= target_rows else target_rows


def _mix_rows_pallas(text2, idx_a, idx_b, s):
    """text2: (B, F); idx_a/idx_b: (N,) int32; s: (N,) f32  ->  (N, F) with

        out[k] = text2[idx_a[k]]                                 if s[k] == 1.0
               = s[k]*text2[idx_a[k]] + (1-s[k])*text2[idx_b[k]] otherwise
    """
    n_out = int(idx_a.shape[0])
    B, F = int(text2.shape[0]), int(text2.shape[1])
    itemsize = jnp.dtype(text2.dtype).itemsize

    # Lane/sublane-dense layout: pad F up to a multiple of 128 on the host so
    # every block is (1, tR, 128) with unmasked vst, then strip the pad.
    F_pad = -(-F // 128) * 128
    if F_pad != F:
        text2 = jnp.pad(text2, ((0, 0), (0, F_pad - F)))
    R = F_pad // 128
    src = text2.reshape(B, R, 128)

    tR = _choose_rows(R, itemsize)
    n_chunks = pl.cdiv(R, tR)

    if n_chunks == 1:
        grid = (n_out,)
        a_spec = pl.BlockSpec((1, R, 128), lambda k, ia, ib, sv: (ia[k], 0, 0))
        b_spec = pl.BlockSpec((1, R, 128), lambda k, ia, ib, sv: (ib[k], 0, 0))
        o_spec = pl.BlockSpec((1, R, 128), lambda k, ia, ib, sv: (k, 0, 0))
        dim_sem = ("parallel",)
    else:
        grid = (n_out, n_chunks)
        a_spec = pl.BlockSpec((1, tR, 128), lambda k, j, ia, ib, sv: (ia[k], j, 0))
        b_spec = pl.BlockSpec((1, tR, 128), lambda k, j, ia, ib, sv: (ib[k], j, 0))
        o_spec = pl.BlockSpec((1, tR, 128), lambda k, j, ia, ib, sv: (k, j, 0))
        dim_sem = ("parallel", "parallel")

    out = pl.pallas_call(
        _mix_kernel,
        out_shape=jax.ShapeDtypeStruct((n_out, R, 128), text2.dtype),
        grid_spec=pltpu.PrefetchScalarGridSpec(
            num_scalar_prefetch=3,
            grid=grid,
            in_specs=[a_spec, b_spec],
            out_specs=o_spec,
        ),
        compiler_params=pltpu.CompilerParams(
            # All output blocks are disjoint -> fully parallel (megacore can
            # shard the row axis on v7x).  TODO(synk): if xprof shows only one
            # TC busy on v7x, switch the leading axis to pltpu.CORE_PARALLEL.
            dimension_semantics=dim_sem,
            # 6 double-buffered <=4 MiB blocks ~ 24 MiB; 48 MiB is safe on
            # v5e/v6e (128 MiB physical) and v7x (64 MiB physical).
            vmem_limit_bytes=48 * 1024 * 1024,
        ),
    )(idx_a, idx_b, s, src, src)

    out = out.reshape(n_out, F_pad)
    if F_pad != F:
        out = out[:, :F]
    return out


def convex_sampler_forward(text, label_ids, *, multiple_ood, ood_label_id=None,
                           seed=0, force_pallas=False):
    """Mirrors ConvexSampler.forward.

    Returns (mix_data, mix_labels):
      mix_data['text']     : concat([text, ood_text]), shape (B + B*multiple_ood, ...)
      mix_labels['ind']    : label_ids (pass-through, as in the reference forward)
      mix_labels['binary'] : 1 for in-distribution rows, 0 for synthetic OOD rows

    `ood_label_id` is accepted for API parity; the reference forward never uses it.
    """
    text = jnp.asarray(text)
    label_np = np.asarray(label_ids)
    B = int(text.shape[0])
    num_ood = B * int(multiple_ood)

    if label_np.shape[0] <= 2:
        # The PyTorch module would leave mix_text undefined (and crash) here.
        raise ValueError("ConvexSampler requires label_ids.size(0) > 2")
    if np.unique(label_np).size < 2:
        # Otherwise the rejection-sampling loop never terminates.
        raise ValueError("ConvexSampler requires at least two distinct labels")
    if text.ndim not in (2, 3):
        raise ValueError("text must be 2-D or 3-D")

    tail = text.shape[1:]
    text2 = text.reshape(B, -1)
    F = int(text2.shape[1])

    # Host-side rejection sampling of convex pairs (mirrors the np.random loop).
    rng = np.random.RandomState(seed)
    pa, pb, ss = [], [], []
    while len(pa) < num_ood:
        cdt = rng.choice(B, 2, replace=False)
        if label_np[cdt[0]] != label_np[cdt[1]]:
            pa.append(int(cdt[0]))
            pb.append(int(cdt[1]))
            ss.append(float(rng.uniform(0.0, 1.0)))

    n_total = B + num_ood
    # Full-output plan: rows [0, B) are identity copies (s == 1.0 exactly),
    # rows [B, B + num_ood) are convex mixes.  One kernel writes everything,
    # so there is no trailing concat (and no extra HBM pass over the result).
    idx_a = jnp.asarray(np.concatenate([np.arange(B), np.asarray(pa)]).astype(np.int32))
    idx_b = jnp.asarray(np.concatenate([np.arange(B), np.asarray(pb)]).astype(np.int32))
    s_all = jnp.asarray(np.concatenate([np.ones(B), np.asarray(ss)]).astype(np.float32))

    itemsize = jnp.dtype(text2.dtype).itemsize
    if force_pallas or F * itemsize >= _PALLAS_MIN_ROW_BYTES:
        mix2 = _mix_rows_pallas(text2, idx_a, idx_b, s_all)
    else:
        # Tiny rows: the ~0.35us/grid-step Pallas overhead would dominate;
        # one XLA gather + lerp is faster and reads text2 far fewer times.
        a = jnp.take(text2, idx_a, axis=0).astype(jnp.float32)
        b = jnp.take(text2, idx_b, axis=0).astype(jnp.float32)
        sc = s_all[:, None]
        mix2 = jnp.where(sc >= 1.0, a, sc * a + (1.0 - sc) * b).astype(text2.dtype)

    mix_text = mix2.reshape((n_total,) + tuple(tail))
    binary_label_ids = jnp.concatenate(
        [jnp.ones((B,), jnp.int32), jnp.zeros((num_ood,), jnp.int32)], axis=0)

    mix_data = {"text": mix_text}
    mix_labels = {"ind": jnp.asarray(label_ids), "binary": binary_label_ids}
    return mix_data, mix_labels


def _numpy_reference(text_np, label_np, multiple_ood, seed):
    """Pure-numpy reference with identical host-side pair sampling."""
    rng = np.random.RandomState(seed)
    B = text_np.shape[0]
    num_ood = B * multiple_ood
    rows = []
    while len(rows) < num_ood:
        cdt = rng.choice(B, 2, replace=False)
        if label_np[cdt[0]] != label_np[cdt[1]]:
            s = np.float32(rng.uniform(0.0, 1.0))
            rows.append(s * text_np[cdt[0]] + (np.float32(1.0) - s) * text_np[cdt[1]])
    return np.concatenate([text_np, np.stack(rows, axis=0)], axis=0)


if __name__ == "__main__":
    B, S, H = 4, 8, 32
    multiple_ood = 2
    num_ood = B * multiple_ood

    key = jax.random.PRNGKey(0)
    text = jax.random.normal(key, (B, S, H), dtype=jnp.float32)
    label_ids = jnp.asarray(np.arange(B) % 3, dtype=jnp.int32)  # >2 rows, >=2 distinct labels

    # --- Pallas path (forced so the kernel is exercised at these small shapes) ---
    mix_data, mix_labels = convex_sampler_forward(
        text, label_ids, multiple_ood=multiple_ood, ood_label_id=3, seed=0,
        force_pallas=True)
    mix_text = np.asarray(jax.block_until_ready(mix_data["text"]))
    binary = np.asarray(jax.block_until_ready(mix_labels["binary"]))

    ref = _numpy_reference(np.asarray(text), np.asarray(label_ids), multiple_ood, seed=0)
    assert mix_text.shape == (B + num_ood, S, H)
    assert binary.shape == (B + num_ood,)
    np.testing.assert_allclose(mix_text, ref, rtol=1e-5, atol=1e-5)
    np.testing.assert_array_equal(
        binary, np.concatenate([np.ones(B), np.zeros(num_ood)]).astype(np.int32))
    np.testing.assert_array_equal(np.asarray(mix_labels["ind"]), np.asarray(label_ids))

    # --- XLA fast path (rows here are tiny, below the Pallas threshold) agrees ---
    fast_data, _ = convex_sampler_forward(
        text, label_ids, multiple_ood=multiple_ood, ood_label_id=3, seed=0,
        force_pallas=False)
    np.testing.assert_allclose(
        np.asarray(jax.block_until_ready(fast_data["text"])), ref, rtol=1e-5, atol=1e-5)

    # --- F % 128 != 0 exercises the host-side lane-padding path ---
    text_odd = jax.random.normal(jax.random.PRNGKey(1), (B, S, 33), dtype=jnp.float32)
    odd_data, _ = convex_sampler_forward(
        text_odd, label_ids, multiple_ood=1, ood_label_id=3, seed=3,
        force_pallas=True)
    ref_odd = _numpy_reference(np.asarray(text_odd), np.asarray(label_ids), 1, seed=3)
    np.testing.assert_allclose(
        np.asarray(jax.block_until_ready(odd_data["text"])), ref_odd, rtol=1e-5, atol=1e-5)

    print("KERNEL_OK")
</pallas_src>

<mosaic_0001>
module attributes {stable_mosaic.version = 11 : i64} {
  func.func @_mix_kernel(%arg0: i32, %arg1: memref<12xi32, #tpu.memory_space<smem>>, %arg2: memref<12xi32, #tpu.memory_space<smem>>, %arg3: memref<12xf32, #tpu.memory_space<smem>>, %arg4: memref<1x2x128xf32, #tpu.memory_space<vmem>>, %arg5: memref<1x2x128xf32, #tpu.memory_space<vmem>>, %arg6: memref<1x2x128xf32, #tpu.memory_space<vmem>>) attributes {dimension_semantics = [#tpu.dimension_semantics<parallel>], iteration_bounds = array<i64: 12>, scalar_prefetch = 3 : i64, scratch_operands = 0 : i64, tpu.core_type = #tpu.core_type<tc>, window_params = [{transform_indices = @transform_0, window_bounds = array<i64: 1, 2, 128>}, {transform_indices = @transform_1, window_bounds = array<i64: 1, 2, 128>}, {transform_indices = @transform_2, window_bounds = array<i64: 1, 2, 128>}]} {
    %0 = arith.index_cast %arg0 : i32 to index
    %1 = memref.load %arg3[%0] : memref<12xf32, #tpu.memory_space<smem>>
    %cst = arith.constant 1.000000e+00 : f32
    %2 = arith.cmpf oge, %1, %cst : f32
    %3 = arith.extui %2 : i1 to i32
    %c0_i32 = arith.constant 0 : i32
    %4 = arith.cmpi ne, %3, %c0_i32 : i32
    scf.if %4 {
      %c0 = arith.constant 0 : index
      %c0_2 = arith.constant 0 : index
      %c0_3 = arith.constant 0 : index
      %8 = vector.load %arg4[%c0, %c0_2, %c0_3] : memref<1x2x128xf32, #tpu.memory_space<vmem>>, vector<1x2x128xf32>
      %c0_4 = arith.constant 0 : index
      %c0_5 = arith.constant 0 : index
      %c0_6 = arith.constant 0 : index
      %9 = vector.load %arg6[%c0_4, %c0_5, %c0_6] : memref<1x2x128xf32, #tpu.memory_space<vmem>>, vector<1x2x128xf32>
      tpu.vector_store %arg6[%c0_4, %c0_5, %c0_6], %8 {strides = array<i32>} : memref<1x2x128xf32, #tpu.memory_space<vmem>>, vector<1x2x128xf32>,
    } else {
    }
    %cst_0 = arith.constant 1.000000e+00 : f32
    %5 = arith.cmpf olt, %1, %cst_0 : f32
    %6 = arith.extui %5 : i1 to i32
    %c0_i32_1 = arith.constant 0 : i32
    %7 = arith.cmpi ne, %6, %c0_i32_1 : i32
    scf.if %7 {
      %c0 = arith.constant 0 : index
      %c0_2 = arith.constant 0 : index
      %c0_3 = arith.constant 0 : index
      %8 = vector.load %arg4[%c0, %c0_2, %c0_3] : memref<1x2x128xf32, #tpu.memory_space<vmem>>, vector<1x2x128xf32>
      %c0_4 = arith.constant 0 : index
      %c0_5 = arith.constant 0 : index
      %c0_6 = arith.constant 0 : index
      %9 = vector.load %arg5[%c0_4, %c0_5, %c0_6] : memref<1x2x128xf32, #tpu.memory_space<vmem>>, vector<1x2x128xf32>
      %10 = vector.broadcast %1 : f32 to vector<1x2x128xf32>
      %11 = arith.mulf %10, %8 : vector<1x2x128xf32>
      %cst_7 = arith.constant 1.000000e+00 : f32
      %12 = arith.subf %cst_7, %1 : f32
      %13 = vector.broadcast %12 : f32 to vector<1x2x128xf32>
      %14 = arith.mulf %13, %9 : vector<1x2x128xf32>
      %15 = arith.addf %11, %14 : vector<1x2x128xf32>
      %c0_8 = arith.constant 0 : index
      %c0_9 = arith.constant 0 : index
      %c0_10 = arith.constant 0 : index
      %16 = vector.load %arg6[%c0_8, %c0_9, %c0_10] : memref<1x2x128xf32, #tpu.memory_space<vmem>>, vector<1x2x128xf32>
      tpu.vector_store %arg6[%c0_8, %c0_9, %c0_10], %15 {strides = array<i32>} : memref<1x2x128xf32, #tpu.memory_space<vmem>>, vector<1x2x128xf32>,
    } else {
    }
    return
  }
  func.func @transform_0(%arg0: i32, %arg1: memref<12xi32, #tpu.memory_space<smem>>, %arg2: memref<12xi32, #tpu.memory_space<smem>>, %arg3: memref<12xf32, #tpu.memory_space<smem>>) -> (i32, i32, i32) {
    %0 = arith.index_cast %arg0 : i32 to index
    %1 = memref.load %arg1[%0] : memref<12xi32, #tpu.memory_space<smem>>
    %c0_i32 = arith.constant 0 : i32
    %c0_i32_0 = arith.constant 0 : i32
    %c0_i32_1 = arith.constant 0 : i32
    return %1, %c0_i32, %c0_i32_0 : i32, i32, i32
  }
  func.func @transform_1(%arg0: i32, %arg1: memref<12xi32, #tpu.memory_space<smem>>, %arg2: memref<12xi32, #tpu.memory_space<smem>>, %arg3: memref<12xf32, #tpu.memory_space<smem>>) -> (i32, i32, i32) {
    %0 = arith.index_cast %arg0 : i32 to index
    %1 = memref.load %arg2[%0] : memref<12xi32, #tpu.memory_space<smem>>
    %c0_i32 = arith.constant 0 : i32
    %c0_i32_0 = arith.constant 0 : i32
    %c0_i32_1 = arith.constant 0 : i32
    return %1, %c0_i32, %c0_i32_0 : i32, i32, i32
  }
  func.func @transform_2(%arg0: i32, %arg1: memref<12xi32, #tpu.memory_space<smem>>, %arg2: memref<12xi32, #tpu.memory_space<smem>>, %arg3: memref<12xf32, #tpu.memory_space<smem>>) -> (i32, i32, i32) {
    %c0_i32 = arith.constant 0 : i32
    %c0_i32_0 = arith.constant 0 : i32
    %c0_i32_1 = arith.constant 0 : i32
    return %arg0, %c0_i32, %c0_i32_0 : i32, i32, i32
  }
}

</mosaic_0001>

<llo_original>
// kernel: tpu_custom_call.1
$region0: #{tpu_custom_call.1}
  #allocation0 [shape = 'u32[]', space=smem, size = 0x4, offset = 0x4, fixed_abs, tag = 'smem constant byte address 0x4 - core index']
  #allocation1 [shape = 'u32[144,128]{1,0:T(1,128)}', space=vmem, size = 0x12000, scoped, tag = 'internal scratch']
  #allocation2 [shape = 's32[1]{0}', space=sflag, size = 0x4, scoped, tag = 'scoped memory for tpu_custom_call.1']
  #allocation3 [shape = 'u8[512]{0}', space=smem, size = 0x200, scoped, tag = 'prefetched SMEM operand 0']
  #allocation4 [shape = 'u8[512]{0}', space=smem, size = 0x200, scoped, tag = 'prefetched SMEM operand 1']
  #allocation5 [shape = 'u8[512]{0}', space=smem, size = 0x200, scoped, tag = 'prefetched SMEM operand 2']
  %s0 = inlined_call_operand.hbm [shape: s32[12], index: 0, kind: input, shape index: {}]
  %s1 = inlined_call_operand.vmem [shape: s32[12], index: 1, kind: input, shape index: {}]
  %s2 = inlined_call_operand.vmem [shape: f32[12], index: 2, kind: input, shape index: {}]
  %s3 = inlined_call_operand.hbm [shape: f32[4,2,128], index: 3, kind: input, shape index: {}]
  %s4 = inlined_call_operand.hbm [shape: f32[4,2,128], index: 4, kind: input, shape index: {}]
  %s5 = inlined_call_operand.hbm [shape: f32[12,2,128], index: 5, kind: output, shape index: {}]
  %s6 = sld [smem:[#allocation0]]
  $region57: #{tpu_custom_call.1} parent=0
    _
  %s8 = ssub.s32 1, %s6
  %s9 = scalar_select 0, %s8, %s6
  %11 = dma.hbm_to_smem %s0, 16, [#allocation3], [#allocation2]
  %s12 = sshll.u32 %s1, 4
  %s13 = int_to_ptr.vmem [resolvable:$true] %s12
  %15 = dma.vmem_to_smem %s13, 16, [#allocation4], [#allocation2]
  %s16 = sshll.u32 %s2, 4
  %s17 = int_to_ptr.vmem [resolvable:$true] %s16
  %19 = dma.vmem_to_smem %s17, 16, [#allocation5], [#allocation2]
  %20 = dma.done [#allocation2], 48
  %21 = sfence
  $region1: #{tpu_custom_call.1} parent=0
    #allocation6 [shape = 'u8[2048]{0}', space=vmem, size = 0x800, scoped, tag = 'input window, operand 3']
    #allocation7 [shape = 's32[2]{0}', space=sflag, size = 0x8, scoped, tag = 'scoped memory for tpu_custom_call.1']
    #allocation8 [shape = 's32[2]{0}', space=sflag, size = 0x8, scoped, tag = 'scoped memory for tpu_custom_call.1']
    #allocation9 [shape = 'u8[2048]{0}', space=vmem, size = 0x800, scoped, tag = 'input window, operand 4']
    #allocation10 [shape = 's32[2]{0}', space=sflag, size = 0x8, scoped, tag = 'scoped memory for tpu_custom_call.1']
    #allocation11 [shape = 'u8[2048]{0}', space=vmem, size = 0x800, scoped, tag = 'output window, operand 0']
    %22 = vsyncpa [#allocation7], 0
    %s23 = scalar_lea.sflag [#allocation7], 1
    %24 = vsyncpa %s23, 0
    %25 = vsyncpa [#allocation10], 0
    %s26 = scalar_lea.sflag [#allocation10], 1
    %27 = vsyncpa %s26, 0
    %28 = vsyncpa [#allocation8], 0
    %s29 = scalar_lea.sflag [#allocation8], 1
    %30 = vsyncpa %s29, 0
    loop: start=0, step=1, limit=14
    $region2: #{tpu_custom_call.1} parent=1 // loop_pre_header
      _
    $region3: #{tpu_custom_call.1} parent=1 // loop_header
      %s32 = sphi 0, %s36
      %p33 = scmp.ge.s32.totalorder %s32, 14
      %s44 = sphi 0, %s46
      %s47 = sphi 0, %s44
      %s48 = sphi 0, %s47
      %s64 = sphi 0, %s48
      %s72 = sphi 0, %s74
      %s75 = sphi 0, %s72
      %s76 = sphi 0, %s75
      %s92 = sphi 0, %s76
      %s98 = sphi 0, %s100
      %s101 = sphi 0, %s98
      %s102 = sphi 0, %s101
      %s118 = sphi 0, %s102
    $region4: #{tpu_custom_call.1} parent=1 // loop_header_branch
      %35 = sbr.rel (%p33) target = $region8
    $region5: #{tpu_custom_call.1} parent=1 // loop_body
      %s37 = ssub.s32 %s32, 1
      %s38 = ssub.s32 %s32, 2
      %s39 = sadd.s32 %s32, 1
      %s40 = sld [smem:[#allocation3 + %s32]]
      %s41 = sld [smem:[#allocation3 + %s39]]
      %s42 = ssub.s32 %s40, %s41
      %p43 = scmp.eq.s32.totalorder %s42, 0
      %s45 = sadd.s32 %s44, 1
      %s46 = scalar_select %p43, %s44, %s45
      %p49 = pneg %p43
      %p50 = scmp.eq.s32.totalorder %s32, 11
      %p51 = por %p49, %p50
      %p52 = scmp.ne.s32.totalorder %s44, %s47
      %p53 = scmp.eq.s32.totalorder %s32, 0
      %p54 = por %p52, %p53
      %p55 = scmp.ne.s32.totalorder %s44, %s47
      %p56 = scmp.eq.s32.totalorder %s37, 11
      %p57 = por %p55, %p56
      %p58 = scmp.ne.s32.totalorder %s47, %s48
      %p59 = scmp.eq.s32.totalorder %s37, 0
      %p60 = por %p58, %p59
      %p61 = scmp.ne.s32.totalorder %s47, %s48
      %p62 = scmp.eq.s32.totalorder %s38, 11
      %p63 = por %p61, %p62
      %p65 = scmp.ne.s32.totalorder %s48, %s64
      %p66 = scmp.eq.s32.totalorder %s38, 0
      %p67 = por %p65, %p66
      %s68 = sld [smem:[#allocation4 + %s32]]
      %s69 = sld [smem:[#allocation4 + %s39]]
      %s70 = ssub.s32 %s68, %s69
      %p71 = scmp.eq.s32.totalorder %s70, 0
      %s73 = sadd.s32 %s72, 1
      %s74 = scalar_select %p71, %s72, %s73
      %p77 = pneg %p71
      %p78 = scmp.eq.s32.totalorder %s32, 11
      %p79 = por %p77, %p78
      %p80 = scmp.ne.s32.totalorder %s72, %s75
      %p81 = scmp.eq.s32.totalorder %s32, 0
      %p82 = por %p80, %p81
      %p83 = scmp.ne.s32.totalorder %s72, %s75
      %p84 = scmp.eq.s32.totalorder %s37, 11
      %p85 = por %p83, %p84
      %p86 = scmp.ne.s32.totalorder %s75, %s76
      %p87 = scmp.eq.s32.totalorder %s37, 0
      %p88 = por %p86, %p87
      %p89 = scmp.ne.s32.totalorder %s75, %s76
      %p90 = scmp.eq.s32.totalorder %s38, 11
      %p91 = por %p89, %p90
      %p93 = scmp.ne.s32.totalorder %s76, %s92
      %p94 = scmp.eq.s32.totalorder %s38, 0
      %p95 = por %p93, %p94
      %s96 = ssub.s32 %s32, %s39
      %p97 = scmp.eq.s32.totalorder %s96, 0
      %s99 = sadd.s32 %s98, 1
      %s100 = scalar_select %p97, %s98, %s99
      %p103 = pneg %p97
      %p104 = scmp.eq.s32.totalorder %s32, 11
      %p105 = por %p103, %p104
      %p106 = scmp.ne.s32.totalorder %s98, %s101
      %p107 = scmp.eq.s32.totalorder %s32, 0
      %p108 = por %p106, %p107
      %p109 = scmp.ne.s32.totalorder %s98, %s101
      %p110 = scmp.eq.s32.totalorder %s37, 11
      %p111 = por %p109, %p110
      %p112 = scmp.ne.s32.totalorder %s101, %s102
      %p113 = scmp.eq.s32.totalorder %s37, 0
      %p114 = por %p112, %p113
      %p115 = scmp.ne.s32.totalorder %s101, %s102
      %p116 = scmp.eq.s32.totalorder %s38, 11
      %p117 = por %p115, %p116
      %p119 = scmp.ne.s32.totalorder %s102, %s118
      %p120 = scmp.eq.s32.totalorder %s38, 0
      %p121 = por %p119, %p120
      %p122 = scmp.le.s32.totalorder 1, %s32
      %p123 = scmp.lt.s32.totalorder %s32, 13
      %p124 = pnand %p122, %p123
      %p125 = pneg %p124
      // Predicated region
      $region9: #{tpu_custom_call.1} parent=5 // pred_check
        _
      $region10: #{tpu_custom_call.1} parent=5 // pred_check_branch
        %127 = sbr.rel (%p124) target = $region12
      $region11: #{tpu_custom_call.1} parent=5 // pred_region
        %s128 = ssub.s32 %s32, 1
      $region12: #{tpu_custom_call.1} parent=5 // pred_fallthru
        _
      %p129 = scmp.lt.s32.totalorder %s32, 12
      // Predicated region
      $region13: #{tpu_custom_call.1} parent=5 // pred_check
        %p130 = pneg %p129
      $region14: #{tpu_custom_call.1} parent=5 // pred_check_branch
        %132 = sbr.rel (%p130) target = $region16
      $region15: #{tpu_custom_call.1} parent=5 // pred_region
        // Predicated region
        $region17: #{tpu_custom_call.1} parent=15 // pred_check
          %p133 = pneg %p54
        $region18: #{tpu_custom_call.1} parent=15 // pred_check_branch
          %135 = sbr.rel (%p133) target = $region20
        $region19: #{tpu_custom_call.1} parent=15 // pred_region
          %s136 = sand.u32 %s44, 1
          %s137 = scalar_lea.sflag [#allocation7], %s136
          %s138 = sand.u32 %s44, 1
          %s139 = smul.addr %s138, 2
          %s140 = scalar_lea.vmem [#allocation6], %s139
          %s141 = sld [smem:[#allocation3 + %s32]]
          %s143 = ssub.s32 32, 32
          %144 = vsyncadd %s137, %s143
          %s145 = smul.addr %s141, 32
          %s146 = scalar_lea.hbm %s3, %s145
          %s148 = sshll.u32 %s140, 4
          %s149 = int_to_ptr.vmem [resolvable:$true] %s148
          %151 = dma.hbm_to_vmem [thread:$0]  %s146, 32, %s149, %s137
        $region20: #{tpu_custom_call.1} parent=15 // pred_fallthru
          _
        // Predicated region
        $region21: #{tpu_custom_call.1} parent=15 // pred_check
          %p152 = pneg %p82
        $region22: #{tpu_custom_call.1} parent=15 // pred_check_branch
          %154 = sbr.rel (%p152) target = $region24
        $region23: #{tpu_custom_call.1} parent=15 // pred_region
          %s155 = sand.u32 %s72, 1
          %s156 = scalar_lea.sflag [#allocation10], %s155
          %s157 = sand.u32 %s72, 1
          %s158 = smul.addr %s157, 2
          %s159 = scalar_lea.vmem [#allocation9], %s158
          %s160 = sld [smem:[#allocation4 + %s32]]
          %s162 = ssub.s32 32, 32
          %163 = vsyncadd %s156, %s162
          %s164 = smul.addr %s160, 32
          %s165 = scalar_lea.hbm %s4, %s164
          %s167 = sshll.u32 %s159, 4
          %s168 = int_to_ptr.vmem [resolvable:$true] %s167
          %170 = dma.hbm_to_vmem [thread:$0]  %s165, 32, %s168, %s156
        $region24: #{tpu_custom_call.1} parent=15 // pred_fallthru
          _
      $region16: #{tpu_custom_call.1} parent=5 // pred_fallthru
        _
      %p171 = scmp.le.s32.totalorder 1, %s32
      %p172 = scmp.lt.s32.totalorder %s32, 13
      %p173 = pnand %p171, %p172
      %p174 = pneg %p173
      // Predicated region
      $region25: #{tpu_custom_call.1} parent=5 // pred_check
        _
      $region26: #{tpu_custom_call.1} parent=5 // pred_check_branch
        %176 = sbr.rel (%p173) target = $region28
      $region27: #{tpu_custom_call.1} parent=5 // pred_region
        %s177 = ssub.s32 %s32, 1
        %s178 = sand.u32 %s47, 1
        %s179 = scalar_lea.sflag [#allocation7], %s178
        %s180 = sand.u32 %s47, 1
        %s181 = smul.addr %s180, 2
        %s182 = scalar_lea.vmem [#allocation6], %s181
        // Predicated region
        $region29: #{tpu_custom_call.1} parent=27 // pred_check
          %p183 = pneg %p60
        $region30: #{tpu_custom_call.1} parent=27 // pred_check_branch
          %185 = sbr.rel (%p183) target = $region32
        $region31: #{tpu_custom_call.1} parent=27 // pred_region
          %186 = dma.done %s179, 32
        $region32: #{tpu_custom_call.1} parent=27 // pred_fallthru
          _
        %s187 = sand.u32 %s75, 1
        %s188 = scalar_lea.sflag [#allocation10], %s187
        %s189 = sand.u32 %s75, 1
        %s190 = smul.addr %s189, 2
        %s191 = scalar_lea.vmem [#allocation9], %s190
        // Predicated region
        $region33: #{tpu_custom_call.1} parent=27 // pred_check
          %p192 = pneg %p88
        $region34: #{tpu_custom_call.1} parent=27 // pred_check_branch
          %194 = sbr.rel (%p192) target = $region36
        $region35: #{tpu_custom_call.1} parent=27 // pred_region
          %195 = dma.done %s188, 32
        $region36: #{tpu_custom_call.1} parent=27 // pred_fallthru
          _
        %s196 = sand.u32 %s47, 1
        %s197 = scalar_lea.sflag [#allocation7], %s196
        %s198 = sand.u32 %s47, 1
        %s199 = smul.addr %s198, 2
        %s200 = scalar_lea.vmem [#allocation6], %s199
        %p201 = pneg %p60
        %p202 = pneg %p57
        %s203 = sand.u32 %s75, 1
        %s204 = scalar_lea.sflag [#allocation10], %s203
        %s205 = sand.u32 %s75, 1
        %s206 = smul.addr %s205, 2
        %s207 = scalar_lea.vmem [#allocation9], %s206
        %p208 = pneg %p88
        %p209 = pneg %p85
        %p210 = pneg %p114
        %p211 = pneg %p111
        %s212 = sand.u32 %s101, 1
        %s213 = scalar_lea.sflag [#allocation8], %s212
        %s214 = sand.u32 %s101, 1
        %s215 = smul.addr %s214, 2
        %s216 = scalar_lea.vmem [#allocation11], %s215
        %s217 = sld [smem:[#allocation3 + %s37]]
        %s218 = sld [smem:[#allocation4 + %s37]]
        %s219 = sld [smem:[#allocation5 + %s37]]
        %p220 = scmp.ge.f32.partialorder %s219, 1.0
        // Predicated region
        $region37: #{tpu_custom_call.1} parent=27 // pred_check
          %p221 = pneg %p220
        $region38: #{tpu_custom_call.1} parent=27 // pred_check_branch
          %223 = sbr.rel (%p221) target = $region40
        $region39: #{tpu_custom_call.1} parent=27 // pred_region
          %v224 = vld [vmem:[%s182] sm:$0x3]
          %225 = vst [vmem:[%s216] sm:$0x3] %v224
        $region40: #{tpu_custom_call.1} parent=27 // pred_fallthru
          _
        %p226 = scmp.lt.f32.partialorder %s219, 1.0
        // Predicated region
        $region41: #{tpu_custom_call.1} parent=27 // pred_check
          %p227 = pneg %p226
        $region42: #{tpu_custom_call.1} parent=27 // pred_check_branch
          %229 = sbr.rel (%p227) target = $region44
        $region43: #{tpu_custom_call.1} parent=27 // pred_region
          %v230 = vld [vmem:[%s182] sm:$0x3]
          %v231 = vld [vmem:[%s191] sm:$0x3]
          %v232 = vstv %s219
          %v233 = vmul.f32 %v232, %v230
          %s234 = ssub.f32 1.0, %s219
          %v235 = vstv %s234
          %v236 = vmul.f32 %v235, %v231
          %v237 = vadd.f32 %v233, %v236
          %238 = vst [vmem:[%s216] sm:$0x3] %v237
        $region44: #{tpu_custom_call.1} parent=27 // pred_fallthru
          _
        %s239 = sand.u32 %s101, 1
        %s240 = scalar_lea.sflag [#allocation8], %s239
        %s241 = sand.u32 %s101, 1
        %s242 = smul.addr %s241, 2
        %s243 = scalar_lea.vmem [#allocation11], %s242
        // Predicated region
        $region45: #{tpu_custom_call.1} parent=27 // pred_check
          %p244 = pneg %p111
        $region46: #{tpu_custom_call.1} parent=27 // pred_check_branch
          %246 = sbr.rel (%p244) target = $region48
        $region47: #{tpu_custom_call.1} parent=27 // pred_region
          %s248 = ssub.s32 32, 32
          %249 = vsyncadd %s240, %s248
          %s250 = smul.addr %s37, 32
          %s251 = scalar_lea.hbm %s5, %s250
          %s253 = sshll.u32 %s243, 4
          %s254 = int_to_ptr.vmem [resolvable:$true] %s253
          %256 = dma.vmem_to_hbm [thread:$0]  %s254, 32, %s251, %s240
        $region48: #{tpu_custom_call.1} parent=27 // pred_fallthru
          _
      $region28: #{tpu_custom_call.1} parent=5 // pred_fallthru
        _
      %p257 = scmp.le.s32.totalorder 2, %s32
      // Predicated region
      $region49: #{tpu_custom_call.1} parent=5 // pred_check
        %p258 = pneg %p257
      $region50: #{tpu_custom_call.1} parent=5 // pred_check_branch
        %260 = sbr.rel (%p258) target = $region52
      $region51: #{tpu_custom_call.1} parent=5 // pred_region
        %s261 = ssub.s32 %s32, 2
        // Predicated region
        $region53: #{tpu_custom_call.1} parent=51 // pred_check
          %p262 = pneg %p117
        $region54: #{tpu_custom_call.1} parent=51 // pred_check_branch
          %264 = sbr.rel (%p262) target = $region56
        $region55: #{tpu_custom_call.1} parent=51 // pred_region
          %s265 = sand.u32 %s102, 1
          %s266 = scalar_lea.sflag [#allocation8], %s265
          %s267 = sand.u32 %s102, 1
          %s268 = smul.addr %s267, 2
          %s269 = scalar_lea.vmem [#allocation11], %s268
          %270 = dma.done %s266, 32
        $region56: #{tpu_custom_call.1} parent=51 // pred_fallthru
          _
      $region52: #{tpu_custom_call.1} parent=5 // pred_fallthru
        _
    $region6: #{tpu_custom_call.1} parent=1 // loop_footer
      %s36 = sadd.s32 1, %s32
    $region7: #{tpu_custom_call.1} parent=1 // loop_footer_branch
      %31 = sbr.rel target = $region3
    $region8: #{tpu_custom_call.1} parent=1 // loop_exit
      _
    %271 = vsyncpa [#allocation7], 1
    %s272 = scalar_lea.sflag [#allocation7], 1
    %273 = vsyncpa %s272, 1
    %274 = vsyncpa [#allocation10], 1
    %s275 = scalar_lea.sflag [#allocation10], 1
    %276 = vsyncpa %s275, 1
    %277 = vsyncpa [#allocation8], 1
    %s278 = scalar_lea.sflag [#allocation8], 1
    %279 = vsyncpa %s278, 1

</llo_original>
